<compile_context>
chip_gen: v7x
topology: tpu7x:2x2x1
jax: 0.10.0
libtpu: 0.0.40
codegen_flags: <defaults>
</compile_context>

<pallas_src>
import math

import jax
import jax.numpy as jnp
from jax.experimental import pallas as pl
from jax.experimental.pallas import tpu as pltpu


def _locked_dropout_kernel(mask_ref, x_ref, o_ref):
    """Hot path: one broadcast multiply per (tile_rows, width) tile."""
    # mask_ref: (8, width) f32, only row 0 is used (8 rows keep the VMEM block
    # sublane-aligned).  x_ref / o_ref: (tile_rows, width) in x.dtype.
    # Multiply promotes to f32 (unbiased for bf16 inputs); cast only on store.
    o_ref[...] = (x_ref[...] * mask_ref[0:1, :]).astype(o_ref.dtype)


def _vmem_budget():
    """Generation-aware per-buffer tile budget and scoped-VMEM request."""
    try:
        cap = int(pltpu.get_tpu_info().vmem_capacity_bytes)
    except Exception:
        cap = 64 * 1024 * 1024  # conservative fallback: v7x per-TC physical VMEM
    # Request at most half the physical VMEM, never more than 64 MiB.
    vmem_limit = min(cap // 2, 64 * 1024 * 1024)       # 32 MiB v7x, 64 MiB v5e/v6e
    # 2 input + 2 output double-buffers must fit comfortably inside that limit.
    per_buffer = max(1 * 1024 * 1024, min(8 * 1024 * 1024, vmem_limit // 8))
    return per_buffer, vmem_limit


def lstm_locked_dropout(x: jax.Array, seed: int, p: float = 0.3,
                        training: bool = True) -> jax.Array:
    """JAX/Pallas equivalent of the PyTorch module's forward."""
    if p <= 0.0 or not training:
        return x

    T, B, H = x.shape
    rows = T * B

    # Locked-dropout mask: Bernoulli(1-p) over the hidden axis, pre-scaled, f32.
    key = jax.random.PRNGKey(seed)
    keep = jax.random.bernoulli(key, 1.0 - p, (H,))
    mask = keep.astype(jnp.float32) * jnp.float32(1.0 / (1.0 - p))  # (H,) f32

    # Lane-dense repack: fold k consecutive (t, b) rows into one so the last dim
    # is a multiple of 128.  Free (contiguous reshape) when rows % k == 0.
    k = 1
    if H % 128 != 0:
        k_needed = 128 // math.gcd(H, 128)
        if rows % k_needed == 0:
            k = k_needed
    # TODO(synk): when rows % k != 0, a pad+repack pass could still help for very
    # small H; skipped here to avoid an extra HBM round trip of the activation.
    rows_p = rows // k
    width = k * H
    x2d = x.reshape(rows_p, width)                                  # free reshape
    mask_row = jnp.tile(mask, (k,)) if k > 1 else mask              # (width,)
    mask8 = jnp.broadcast_to(mask_row[None, :], (8, width))         # aligned block

    # Row-tile sizing against the generation-aware budget; multiple of the
    # dtype's sublane pack so packed row-pairs/quads are never split.
    itemsize = x.dtype.itemsize
    sublane_pack = max(8, 32 // itemsize)           # 8 f32 / 16 bf16 / 32 int8-fp8
    per_buffer, vmem_limit = _vmem_budget()
    bytes_per_row = max(1, width * itemsize)
    max_tile_rows = max(sublane_pack, per_buffer // bytes_per_row)
    max_tile_rows = max(sublane_pack, (max_tile_rows // sublane_pack) * sublane_pack)
    tile_rows = rows_p if rows_p <= max_tile_rows else max_tile_rows
    grid = (pl.cdiv(rows_p, tile_rows),)

    cost = pl.CostEstimate(
        flops=rows_p * width,
        transcendentals=0,
        bytes_accessed=2 * rows_p * width * itemsize + 8 * width * 4,
    )

    def _run(dim_sem):
        return pl.pallas_call(
            _locked_dropout_kernel,
            out_shape=jax.ShapeDtypeStruct((rows_p, width), x.dtype),
            grid=grid,
            in_specs=[
                pl.BlockSpec((8, width), lambda i: (0, 0)),           # mask (resident)
                pl.BlockSpec((tile_rows, width), lambda i: (i, 0)),   # x row tile
            ],
            out_specs=pl.BlockSpec((tile_rows, width), lambda i: (i, 0)),
            compiler_params=pltpu.CompilerParams(
                dimension_semantics=(dim_sem,),
                vmem_limit_bytes=vmem_limit),
            cost_estimate=cost,
        )(mask8, x2d)

    out2d = None
    core_parallel = getattr(pltpu, "CORE_PARALLEL", None)
    if core_parallel is not None:
        try:
            out2d = jax.block_until_ready(_run(core_parallel))
        except Exception:
            out2d = None                 # target/build rejects CORE_PARALLEL here
    if out2d is None:
        out2d = _run("parallel")

    return out2d.reshape(T, B, H)


if __name__ == "__main__":
    # Shapes consistent with an LSTM activation: (seq=8, batch=2, hidden=32).
    T, B, H = 8, 2, 32
    p, seed = 0.3, 0
    x = jax.random.normal(jax.random.PRNGKey(0), (T, B, H), dtype=jnp.float32)

    y = jax.block_until_ready(lstm_locked_dropout(x, seed=seed, p=p, training=True))

    # Reference: identical mask derivation, plain broadcast multiply in JAX.
    keep = jax.random.bernoulli(jax.random.PRNGKey(seed), 1.0 - p, (H,))
    mask = keep.astype(jnp.float32) / jnp.float32(1.0 - p)
    ref = (x * mask[None, None, :]).astype(x.dtype)
    assert bool(jnp.allclose(y, ref, rtol=1e-6, atol=1e-6)), "mismatch vs reference"

    # Eval / p<=0 paths are identity.
    assert bool(jnp.all(lstm_locked_dropout(x, seed=seed, p=p, training=False) == x))
    assert bool(jnp.all(lstm_locked_dropout(x, seed=seed, p=0.0, training=True) == x))

    # Exercise the non-repacked path (H % 128 == 0) with a bf16 input and a
    # row count that is not a multiple of the sublane pack.
    x2 = jax.random.normal(jax.random.PRNGKey(1), (5, 3, 256), dtype=jnp.bfloat16)
    y2 = jax.block_until_ready(lstm_locked_dropout(x2, seed=7, p=0.5, training=True))
    keep2 = jax.random.bernoulli(jax.random.PRNGKey(7), 0.5, (256,))
    mask2 = keep2.astype(jnp.float32) / jnp.float32(0.5)
    ref2 = (x2.astype(jnp.float32) * mask2[None, None, :]).astype(jnp.bfloat16)
    assert bool(jnp.allclose(y2.astype(jnp.float32), ref2.astype(jnp.float32),
                             rtol=1e-2, atol=1e-2)), "bf16 path mismatch"

    print("KERNEL_OK")
</pallas_src>

<mosaic_0001>
module attributes {stable_mosaic.version = 11 : i64} {
  func.func @_locked_dropout_kernel(%arg0: i32, %arg1: memref<8x128xf32, #tpu.memory_space<vmem>>, %arg2: memref<4x128xf32, #tpu.memory_space<vmem>>, %arg3: memref<4x128xf32, #tpu.memory_space<vmem>>) attributes {dimension_semantics = [#tpu.dimension_semantics<core_parallel>], iteration_bounds = array<i64: 1>, scalar_prefetch = 0 : i64, scratch_operands = 0 : i64, tpu.core_type = #tpu.core_type<tc>, window_params = [{pipeline_mode = #tpu.pipeline_mode<synchronous>, transform_indices = @transform_0, window_bounds = array<i64: 8, 128>}, {transform_indices = @transform_1, window_bounds = array<i64: 4, 128>}, {transform_indices = @transform_2, window_bounds = array<i64: 4, 128>}]} {
    %c0 = arith.constant 0 : index
    %c0_0 = arith.constant 0 : index
    %0 = vector.load %arg2[%c0, %c0_0] : memref<4x128xf32, #tpu.memory_space<vmem>>, vector<4x128xf32>
    %c0_1 = arith.constant 0 : index
    %c0_2 = arith.constant 0 : index
    %1 = vector.load %arg1[%c0_1, %c0_2] : memref<8x128xf32, #tpu.memory_space<vmem>>, vector<1x128xf32>
    %2 = vector.broadcast %1 : vector<1x128xf32> to vector<4x128xf32>
    %3 = arith.mulf %0, %2 : vector<4x128xf32>
    %c0_3 = arith.constant 0 : index
    %c0_4 = arith.constant 0 : index
    %4 = vector.load %arg3[%c0_3, %c0_4] : memref<4x128xf32, #tpu.memory_space<vmem>>, vector<4x128xf32>
    tpu.vector_store %arg3[%c0_3, %c0_4], %3 {strides = array<i32>} : memref<4x128xf32, #tpu.memory_space<vmem>>, vector<4x128xf32>,
    return
  }
  func.func @transform_0(%arg0: i32) -> (i32, i32) {
    %c0_i32 = arith.constant 0 : i32
    %c0_i32_0 = arith.constant 0 : i32
    %c0_i32_1 = arith.constant 0 : i32
    return %c0_i32, %c0_i32_0 : i32, i32
  }
  func.func @transform_1(%arg0: i32) -> (i32, i32) {
    %c0_i32 = arith.constant 0 : i32
    %c0_i32_0 = arith.constant 0 : i32
    return %arg0, %c0_i32 : i32, i32
  }
  func.func @transform_2(%arg0: i32) -> (i32, i32) {
    %c0_i32 = arith.constant 0 : i32
    %c0_i32_0 = arith.constant 0 : i32
    return %arg0, %c0_i32 : i32, i32
  }
}

module attributes {stable_mosaic.version = 11 : i64} {
  func.func @_locked_dropout_kernel(%arg0: i32, %arg1: memref<8x128xf32, #tpu.memory_space<vmem>>, %arg2: memref<4x128xf32, #tpu.memory_space<vmem>>, %arg3: memref<4x128xf32, #tpu.memory_space<vmem>>) attributes {dimension_semantics = [#tpu.dimension_semantics<parallel>], iteration_bounds = array<i64: 1>, scalar_prefetch = 0 : i64, scratch_operands = 0 : i64, tpu.core_type = #tpu.core_type<tc>, window_params = [{pipeline_mode = #tpu.pipeline_mode<synchronous>, transform_indices = @transform_0, window_bounds = array<i64: 8, 128>}, {transform_indices = @transform_1, window_bounds = array<i64: 4, 128>}, {transform_indices = @transform_2, window_bounds = array<i64: 4, 128>}]} {
    %c0 = arith.constant 0 : index
    %c0_0 = arith.constant 0 : index
    %0 = vector.load %arg2[%c0, %c0_0] : memref<4x128xf32, #tpu.memory_space<vmem>>, vector<4x128xf32>
    %c0_1 = arith.constant 0 : index
    %c0_2 = arith.constant 0 : index
    %1 = vector.load %arg1[%c0_1, %c0_2] : memref<8x128xf32, #tpu.memory_space<vmem>>, vector<1x128xf32>
    %2 = vector.broadcast %1 : vector<1x128xf32> to vector<4x128xf32>
    %3 = arith.mulf %0, %2 : vector<4x128xf32>
    %c0_3 = arith.constant 0 : index
    %c0_4 = arith.constant 0 : index
    %4 = vector.load %arg3[%c0_3, %c0_4] : memref<4x128xf32, #tpu.memory_space<vmem>>, vector<4x128xf32>
    tpu.vector_store %arg3[%c0_3, %c0_4], %3 {strides = array<i32>} : memref<4x128xf32, #tpu.memory_space<vmem>>, vector<4x128xf32>,
    return
  }
  func.func @transform_0(%arg0: i32) -> (i32, i32) {
    %c0_i32 = arith.constant 0 : i32
    %c0_i32_0 = arith.constant 0 : i32
    %c0_i32_1 = arith.constant 0 : i32
    return %c0_i32, %c0_i32_0 : i32, i32
  }
  func.func @transform_1(%arg0: i32) -> (i32, i32) {
    %c0_i32 = arith.constant 0 : i32
    %c0_i32_0 = arith.constant 0 : i32
    return %arg0, %c0_i32 : i32, i32
  }
  func.func @transform_2(%arg0: i32) -> (i32, i32) {
    %c0_i32 = arith.constant 0 : i32
    %c0_i32_0 = arith.constant 0 : i32
    return %arg0, %c0_i32 : i32, i32
  }
}

</mosaic_0001>

<llo_original>
// kernel: tpu_custom_call.1
$region0: #{tpu_custom_call.1}
  #allocation0 [shape = 'u32[]', space=smem, size = 0x4, offset = 0x4, fixed_abs, tag = 'smem constant byte address 0x4 - core index']
  #allocation1 [shape = 'u32[144,128]{1,0:T(1,128)}', space=vmem, size = 0x12000, scoped, tag = 'internal scratch']
  %s0 = inlined_call_operand.hbm [shape: f32[8,128], index: 0, kind: input, shape index: {}]
  %s1 = inlined_call_operand.hbm [shape: f32[4,128], index: 1, kind: input, shape index: {}]
  %s2 = inlined_call_operand.hbm [shape: f32[4,128], index: 2, kind: output, shape index: {}]
  %s3 = sld [smem:[#allocation0]]
  $region26: #{tpu_custom_call.1} parent=0
    _
  %s5 = ssub.s32 1, %s3
  %s6 = scalar_select 0, %s5, %s3
  $region1: #{tpu_custom_call.1} parent=0
    #allocation2 [shape = 'u8[4096]{0}', space=vmem, size = 0x1000, scoped, tag = 'input window, operand 0, single buffered']
    #allocation3 [shape = 's32[1]{0}', space=sflag, size = 0x4, scoped, tag = 'scoped memory for tpu_custom_call.1']
    #allocation4 [shape = 's32[1]{0}', space=sflag, size = 0x4, scoped, tag = 'scoped memory for tpu_custom_call.1']
    #allocation5 [shape = 'u8[2048]{0}', space=vmem, size = 0x800, scoped, tag = 'input window, operand 1, single buffered']
    #allocation6 [shape = 's32[1]{0}', space=sflag, size = 0x4, scoped, tag = 'scoped memory for tpu_custom_call.1']
    #allocation7 [shape = 'u8[2048]{0}', space=vmem, size = 0x800, scoped, tag = 'output window, operand 0, single buffered']
    %7 = vsyncpa [#allocation3], 0
    %8 = vsyncpa [#allocation6], 0
    %9 = vsyncpa [#allocation4], 0
    // Predicated region
    $region2: #{tpu_custom_call.1} parent=1 // pred_check
      _
    $region3: #{tpu_custom_call.1} parent=1 // pred_check_branch
      %11 = sbr.rel (0) target = $region5
    $region4: #{tpu_custom_call.1} parent=1 // pred_region
      %s13 = ssub.s32 128, 128
      %14 = vsyncadd [#allocation3], %s13
      %s16 = sshll.u32 [#allocation2], 4
      %s17 = int_to_ptr.vmem [resolvable:$true] %s16
      %19 = dma.hbm_to_vmem [thread:$0]  %s0, 128, %s17, [#allocation3]
    $region5: #{tpu_custom_call.1} parent=1 // pred_fallthru
      _
    // Predicated region
    $region6: #{tpu_custom_call.1} parent=1 // pred_check
      _
    $region7: #{tpu_custom_call.1} parent=1 // pred_check_branch
      %21 = sbr.rel (0) target = $region9
    $region8: #{tpu_custom_call.1} parent=1 // pred_region
      %s23 = ssub.s32 64, 64
      %24 = vsyncadd [#allocation6], %s23
      %s25 = smul.addr %s6, 64
      %s26 = scalar_lea.hbm %s1, %s25
      %s28 = sshll.u32 [#allocation5], 4
      %s29 = int_to_ptr.vmem [resolvable:$true] %s28
      %31 = dma.hbm_to_vmem [thread:$0]  %s26, 64, %s29, [#allocation6]
    $region9: #{tpu_custom_call.1} parent=1 // pred_fallthru
      _
    // Predicated region
    $region10: #{tpu_custom_call.1} parent=1 // pred_check
      _
    $region11: #{tpu_custom_call.1} parent=1 // pred_check_branch
      %33 = sbr.rel (0) target = $region13
    $region12: #{tpu_custom_call.1} parent=1 // pred_region
      %34 = dma.done [#allocation3], 128
    $region13: #{tpu_custom_call.1} parent=1 // pred_fallthru
      _
    // Predicated region
    $region14: #{tpu_custom_call.1} parent=1 // pred_check
      _
    $region15: #{tpu_custom_call.1} parent=1 // pred_check_branch
      %36 = sbr.rel (0) target = $region17
    $region16: #{tpu_custom_call.1} parent=1 // pred_region
      %37 = dma.done [#allocation6], 64
    $region17: #{tpu_custom_call.1} parent=1 // pred_fallthru
      _
    %v38 = vld [vmem:[#allocation5] sm:$0xf]
    %v39 = vld [vmem:[#allocation2] sm:$0x1]
    %v40 = vlaneseq
    %v41 = vshrl.u32 %v40, 7
    %v42 = vsub.s32 0, %v41
    %v43 = vrot.slane %v39, %v42
    %v44 = vmul.f32 %v38, %v43
    %45 = vst [vmem:[#allocation7] sm:$0xf] %v44
    // Predicated region
    $region18: #{tpu_custom_call.1} parent=1 // pred_check
      _
    $region19: #{tpu_custom_call.1} parent=1 // pred_check_branch
      %47 = sbr.rel (0) target = $region21
    $region20: #{tpu_custom_call.1} parent=1 // pred_region
      %s49 = ssub.s32 64, 64
      %50 = vsyncadd [#allocation4], %s49
      %s51 = smul.addr %s6, 64
      %s52 = scalar_lea.hbm %s2, %s51
      %s54 = sshll.u32 [#allocation7], 4
      %s55 = int_to_ptr.vmem [resolvable:$true] %s54
      %57 = dma.vmem_to_hbm [thread:$0]  %s55, 64, %s52, [#allocation4]
    $region21: #{tpu_custom_call.1} parent=1 // pred_fallthru
      _
    // Predicated region
    $region22: #{tpu_custom_call.1} parent=1 // pred_check
      _
    $region23: #{tpu_custom_call.1} parent=1 // pred_check_branch
      %59 = sbr.rel (0) target = $region25
    $region24: #{tpu_custom_call.1} parent=1 // pred_region
      %60 = dma.done [#allocation4], 64
    $region25: #{tpu_custom_call.1} parent=1 // pred_fallthru
      _
    %61 = vsyncpa [#allocation3], 1
    %62 = vsyncpa [#allocation6], 1
    %63 = vsyncpa [#allocation4], 1

// kernel: tpu_custom_call.1
$region0: #{tpu_custom_call.1}
  #allocation0 [shape = 'u32[]', space=smem, size = 0x4, offset = 0x4, fixed_abs, tag = 'smem constant byte address 0x4 - core index']
  #allocation1 [shape = 'u32[144,128]{1,0:T(1,128)}', space=vmem, size = 0x12000, scoped, tag = 'internal scratch']
  %s0 = inlined_call_operand.hbm [shape: f32[8,128], index: 0, kind: input, shape index: {}]
  %s1 = inlined_call_operand.hbm [shape: f32[4,128], index: 1, kind: input, shape index: {}]
  %s2 = inlined_call_operand.hbm [shape: f32[4,128], index: 2, kind: output, shape index: {}]
  %s3 = sld [smem:[#allocation0]]
  $region26: #{tpu_custom_call.1} parent=0
    _
  %s5 = ssub.s32 1, %s3
  %s6 = scalar_select 0, %s5, %s3
  $region1: #{tpu_custom_call.1} parent=0
    #allocation2 [shape = 'u8[4096]{0}', space=vmem, size = 0x1000, scoped, tag = 'input window, operand 0, single buffered']
    #allocation3 [shape = 's32[1]{0}', space=sflag, size = 0x4, scoped, tag = 'scoped memory for tpu_custom_call.1']
    #allocation4 [shape = 's32[1]{0}', space=sflag, size = 0x4, scoped, tag = 'scoped memory for tpu_custom_call.1']
    #allocation5 [shape = 'u8[2048]{0}', space=vmem, size = 0x800, scoped, tag = 'input window, operand 1, single buffered']
    #allocation6 [shape = 's32[1]{0}', space=sflag, size = 0x4, scoped, tag = 'scoped memory for tpu_custom_call.1']
    #allocation7 [shape = 'u8[2048]{0}', space=vmem, size = 0x800, scoped, tag = 'output window, operand 0, single buffered']
    %7 = vsyncpa [#allocation3], 0
    %8 = vsyncpa [#allocation6], 0
    %9 = vsyncpa [#allocation4], 0
    // Predicated region
    $region2: #{tpu_custom_call.1} parent=1 // pred_check
      _
    $region3: #{tpu_custom_call.1} parent=1 // pred_check_branch
      %11 = sbr.rel (0) target = $region5
    $region4: #{tpu_custom_call.1} parent=1 // pred_region
      %s13 = ssub.s32 128, 128
      %14 = vsyncadd [#allocation3], %s13
      %s16 = sshll.u32 [#allocation2], 4
      %s17 = int_to_ptr.vmem [resolvable:$true] %s16
      %19 = dma.hbm_to_vmem [thread:$0]  %s0, 128, %s17, [#allocation3]
    $region5: #{tpu_custom_call.1} parent=1 // pred_fallthru
      _
    // Predicated region
    $region6: #{tpu_custom_call.1} parent=1 // pred_check
      _
    $region7: #{tpu_custom_call.1} parent=1 // pred_check_branch
      %21 = sbr.rel (0) target = $region9
    $region8: #{tpu_custom_call.1} parent=1 // pred_region
      %s23 = ssub.s32 64, 64
      %24 = vsyncadd [#allocation6], %s23
      %s26 = sshll.u32 [#allocation5], 4
      %s27 = int_to_ptr.vmem [resolvable:$true] %s26
      %29 = dma.hbm_to_vmem [thread:$0]  %s1, 64, %s27, [#allocation6]
    $region9: #{tpu_custom_call.1} parent=1 // pred_fallthru
      _
    // Predicated region
    $region10: #{tpu_custom_call.1} parent=1 // pred_check
      _
    $region11: #{tpu_custom_call.1} parent=1 // pred_check_branch
      %31 = sbr.rel (0) target = $region13
    $region12: #{tpu_custom_call.1} parent=1 // pred_region
      %32 = dma.done [#allocation3], 128
    $region13: #{tpu_custom_call.1} parent=1 // pred_fallthru
      _
    // Predicated region
    $region14: #{tpu_custom_call.1} parent=1 // pred_check
      _
    $region15: #{tpu_custom_call.1} parent=1 // pred_check_branch
      %34 = sbr.rel (0) target = $region17
    $region16: #{tpu_custom_call.1} parent=1 // pred_region
      %35 = dma.done [#allocation6], 64
    $region17: #{tpu_custom_call.1} parent=1 // pred_fallthru
      _
    %v36 = vld [vmem:[#allocation5] sm:$0xf]
    %v37 = vld [vmem:[#allocation2] sm:$0x1]
    %v38 = vlaneseq
    %v39 = vshrl.u32 %v38, 7
    %v40 = vsub.s32 0, %v39
    %v41 = vrot.slane %v37, %v40
    %v42 = vmul.f32 %v36, %v41
    %43 = vst [vmem:[#allocation7] sm:$0xf] %v42
    // Predicated region
    $region18: #{tpu_custom_call.1} parent=1 // pred_check
      _
    $region19: #{tpu_custom_call.1} parent=1 // pred_check_branch
      %45 = sbr.rel (0) target = $region21
    $region20: #{tpu_custom_call.1} parent=1 // pred_region
      %s47 = ssub.s32 64, 64
      %48 = vsyncadd [#allocation4], %s47
      %s50 = sshll.u32 [#allocation7], 4
      %s51 = int_to_ptr.vmem [resolvable:$true] %s50
      %53 = dma.vmem_to_hbm [thread:$0]  %s51, 64, %s2, [#allocation4]
    $region21: #{tpu_custom_call.1} parent=1 // pred_fallthru
      _
    // Predicated region
    $region22: #{tpu_custom_call.1} parent=1 // pred_check
      _
    $region23: #{tpu_custom_call.1} parent=1 // pred_check_branch
      %55 = sbr.rel (0) target = $region25
    $region24: #{tpu_custom_call.1} parent=1 // pred_region
      %56 = dma.done [#allocation4], 64
    $region25: #{tpu_custom_call.1} parent=1 // pred_fallthru
      _
    %57 = vsyncpa [#allocation3], 1
    %58 = vsyncpa [#allocation6], 1
    %59 = vsyncpa [#allocation4], 1

</llo_original>
